<compile_context>
chip_gen: v5e
topology: v5e:2x2
jax: 0.10.0
libtpu: 0.0.40
codegen_flags: <defaults>
</compile_context>

<pallas_src>
import functools

import jax
import jax.numpy as jnp
from jax.experimental import pallas as pl
from jax.experimental.pallas import tpu as pltpu


def _hazard_kernel(x_ref, m_ref, o_ref):
    """One (tb, C_in) tile of x times the resident folded mask (C_in, C_out)."""
    o_ref[...] = jnp.dot(
        x_ref[...], m_ref[...], preferred_element_type=jnp.float32
    ).astype(o_ref.dtype)


def _round_up(n, m):
    return ((n + m - 1) // m) * m


def _folded_mask(T, dtype):
    """(T+1, T): rows 0..T-1 are upper-triangular (i <= j), row T (base) is 1."""
    i = jnp.arange(T + 1, dtype=jnp.int32)[:, None]
    j = jnp.arange(T, dtype=jnp.int32)[None, :]
    return ((i <= j) | (i == T)).astype(dtype)


@functools.partial(jax.jit, static_argnames=("block_rows",))
def hazard_layer(x, *, block_rows=4096):
    """x: (B, T+1) -> (B, T), matching Hazard_Layer.forward exactly."""
    B, D = x.shape
    T = D - 1
    dtype = x.dtype
    itemsize = jnp.dtype(dtype).itemsize

    base_mask = _folded_mask(T, dtype)                     # (D, T)

    # Lane packing: fold `pack` consecutive batch rows into one packed row so
    # output stores are ~128-lane dense. Reshapes are free (row-major contig).
    pack = max(1, 128 // T) if T > 0 else 1
    if pack > 1 and B % pack == 0:
        rows = B // pack
        in_cols = pack * D
        out_cols = pack * T
        x_in = x.reshape(rows, in_cols)
        mask = jnp.kron(jnp.eye(pack, dtype=dtype), base_mask)   # block-diag
    else:
        pack = 1
        rows, in_cols, out_cols = B, D, T
        x_in = x
        mask = base_mask

    # Batch tile: multiple of 8 sublanes, MiB-scale DMA, and capped so the
    # grid has >= 2 steps when possible (v7x has 2 TensorCores per chip).
    tb = min(block_rows, _round_up(pl.cdiv(rows, 2), 8))
    if tb >= rows:
        tb = rows                                          # single full block
    grid = (pl.cdiv(rows, tb),)

    out = pl.pallas_call(
        _hazard_kernel,
        out_shape=jax.ShapeDtypeStruct((rows, out_cols), dtype),
        grid=grid,
        in_specs=[
            pl.BlockSpec((tb, in_cols), lambda i: (i, 0)),
            # Constant block index -> mask fetched once, resident in VMEM.
            pl.BlockSpec((in_cols, out_cols), lambda i: (0, 0)),
        ],
        out_specs=pl.BlockSpec((tb, out_cols), lambda i: (i, 0)),
        compiler_params=pltpu.CompilerParams(
            dimension_semantics=("parallel",),
        ),
        cost_estimate=pl.CostEstimate(
            flops=2 * rows * in_cols * out_cols,
            transcendentals=0,
            bytes_accessed=itemsize
            * (rows * in_cols + in_cols * out_cols + rows * out_cols),
        ),
    )(x_in, mask)

    if pack > 1:
        out = out.reshape(B, T)                            # free reshape back
    return out


def _reference(x):
    """Pure-JAX reference matching the PyTorch module exactly."""
    T = x.shape[1] - 1
    mask = jnp.tril(jnp.ones((T, T), dtype=x.dtype)).T
    return x[:, :T] @ mask + x[:, T:]


if __name__ == "__main__":
    max_followup = 8                       # T
    D = max_followup + 1
    key = jax.random.PRNGKey(0)
    k1, k2 = jax.random.split(key)

    # 1) Lane-packed path: B divisible by pack=16 -> (16, 144) @ (144, 128).
    B1 = 256
    xa = jax.random.normal(k1, (B1, D), dtype=jnp.float32)
    out_a = jax.block_until_ready(hazard_layer(xa))
    ref_a = _reference(xa)
    assert out_a.shape == (B1, max_followup)
    assert jnp.allclose(out_a, ref_a, atol=1e-5, rtol=1e-5), float(
        jnp.max(jnp.abs(out_a - ref_a)))

    # 2) Unpacked fallback + ragged last grid block (B not a multiple of 16/8).
    B2 = 50
    xb = jax.random.normal(k2, (B2, D), dtype=jnp.float32)
    out_b = jax.block_until_ready(hazard_layer(xb))
    ref_b = _reference(xb)
    assert out_b.shape == (B2, max_followup)
    assert jnp.allclose(out_b, ref_b, atol=1e-5, rtol=1e-5), float(
        jnp.max(jnp.abs(out_b - ref_b)))

    print("KERNEL_OK")
</pallas_src>

<mosaic_0001>
module attributes {stable_mosaic.version = 11 : i64} {
  func.func @_hazard_kernel(%arg0: i32, %arg1: memref<8x144xf32, #tpu.memory_space<vmem>>, %arg2: memref<144x128xf32, #tpu.memory_space<vmem>>, %arg3: memref<8x128xf32, #tpu.memory_space<vmem>>) attributes {dimension_semantics = [#tpu.dimension_semantics<parallel>], iteration_bounds = array<i64: 2>, scalar_prefetch = 0 : i64, scratch_operands = 0 : i64, tpu.core_type = #tpu.core_type<tc>, window_params = [{transform_indices = @transform_0, window_bounds = array<i64: 8, 144>}, {pipeline_mode = #tpu.pipeline_mode<synchronous>, transform_indices = @transform_1, window_bounds = array<i64: 144, 128>}, {transform_indices = @transform_2, window_bounds = array<i64: 8, 128>}]} {
    %c0 = arith.constant 0 : index
    %c0_0 = arith.constant 0 : index
    %0 = vector.load %arg1[%c0, %c0_0] : memref<8x144xf32, #tpu.memory_space<vmem>>, vector<8x144xf32>
    %c0_1 = arith.constant 0 : index
    %c0_2 = arith.constant 0 : index
    %1 = vector.load %arg2[%c0_1, %c0_2] : memref<144x128xf32, #tpu.memory_space<vmem>>, vector<144x128xf32>
    %cst = arith.constant dense<0.000000e+00> : vector<8x128xf32>
    %2 = tpu.matmul %0, %1, %cst {dimension_numbers = #tpu.dot_dimension_numbers<[1], [0], [0], [1], [0, 0, 1, 1], [], []>} : vector<8x144xf32>, vector<144x128xf32>, vector<8x128xf32> -> vector<8x128xf32>
    %c0_3 = arith.constant 0 : index
    %c0_4 = arith.constant 0 : index
    %3 = vector.load %arg3[%c0_3, %c0_4] : memref<8x128xf32, #tpu.memory_space<vmem>>, vector<8x128xf32>
    tpu.vector_store %arg3[%c0_3, %c0_4], %2 {strides = array<i32>} : memref<8x128xf32, #tpu.memory_space<vmem>>, vector<8x128xf32>,
    return
  }
  func.func @transform_0(%arg0: i32) -> (i32, i32) {
    %c0_i32 = arith.constant 0 : i32
    %c0_i32_0 = arith.constant 0 : i32
    return %arg0, %c0_i32 : i32, i32
  }
  func.func @transform_1(%arg0: i32) -> (i32, i32) {
    %c0_i32 = arith.constant 0 : i32
    %c0_i32_0 = arith.constant 0 : i32
    %c0_i32_1 = arith.constant 0 : i32
    return %c0_i32, %c0_i32_0 : i32, i32
  }
  func.func @transform_2(%arg0: i32) -> (i32, i32) {
    %c0_i32 = arith.constant 0 : i32
    %c0_i32_0 = arith.constant 0 : i32
    return %arg0, %c0_i32 : i32, i32
  }
}

</mosaic_0001>

<llo_original>
// kernel: hazard_layer.1
$region0: #{hazard_layer.1}
  #allocation0 [shape = 'u32[]', space=smem, size = 0x4, offset = 0x4, fixed_abs, tag = 'smem constant byte address 0x4 - core index']
  #allocation1 [shape = 'u32[72,128]{1,0:T(1,128)}', space=vmem, size = 0x9000, scoped, tag = 'internal scratch']
  %s0 = inlined_call_operand.vmem [shape: f32[16,144], index: 0, kind: input, shape index: {}]
  %s1 = inlined_call_operand.vmem [shape: f32[144,128], index: 1, kind: input, shape index: {}]
  %s2 = inlined_call_operand.vmem [shape: f32[16,128], index: 2, kind: output, shape index: {}]
  %s3 = sld [smem:[#allocation0]]
  $region41: #{hazard_layer.1} parent=0
    _
  %s5 = ssub.s32 1, %s3
  %s6 = scalar_select 0, %s5, %s3
  loop: start=0, step=1, limit=4
  $region2: #{hazard_layer.1} parent=0 // loop_pre_header
    _
  $region3: #{hazard_layer.1} parent=0 // loop_header
    %s8 = sphi 0, %s12
    %p9 = scmp.ge.s32.totalorder %s8, 4
    %s18 = sphi 0, %s20
    %s21 = sphi 0, %s18
    %s22 = sphi 0, %s21
    %s38 = sphi 0, %s22
    %s42 = sphi 0, %s42
    %s44 = sphi 0, %s42
    %s45 = sphi 0, %s44
    %s59 = sphi 0, %s45
    %s65 = sphi 0, %s67
    %s68 = sphi 0, %s65
    %s69 = sphi 0, %s68
    %s85 = sphi 0, %s69
  $region4: #{hazard_layer.1} parent=0 // loop_header_branch
    %11 = sbr.rel (%p9) target = $region8
  $region5: #{hazard_layer.1} parent=0 // loop_body
    %s13 = ssub.s32 %s8, 1
    %s14 = ssub.s32 %s8, 2
    %s15 = sadd.s32 %s8, 1
    %s16 = ssub.s32 %s8, %s15
    %p17 = scmp.eq.s32.totalorder %s16, 0
    %s19 = sadd.s32 %s18, 1
    %s20 = scalar_select %p17, %s18, %s19
    %p23 = pneg %p17
    %p24 = scmp.eq.s32.totalorder %s8, 1
    %p25 = por %p23, %p24
    %p26 = scmp.ne.s32.totalorder %s18, %s21
    %p27 = scmp.eq.s32.totalorder %s8, 0
    %p28 = por %p26, %p27
    %p29 = scmp.ne.s32.totalorder %s18, %s21
    %p30 = scmp.eq.s32.totalorder %s13, 1
    %p31 = por %p29, %p30
    %p32 = scmp.ne.s32.totalorder %s21, %s22
    %p33 = scmp.eq.s32.totalorder %s13, 0
    %p34 = por %p32, %p33
    %p35 = scmp.ne.s32.totalorder %s21, %s22
    %p36 = scmp.eq.s32.totalorder %s14, 1
    %p37 = por %p35, %p36
    %p39 = scmp.ne.s32.totalorder %s22, %s38
    %p40 = scmp.eq.s32.totalorder %s14, 0
    %p41 = por %p39, %p40
    %s43 = sadd.s32 %s42, 1
    %p46 = scmp.eq.s32.totalorder %s8, 1
    %p47 = scmp.ne.s32.totalorder %s42, %s44
    %p48 = scmp.eq.s32.totalorder %s8, 0
    %p49 = por %p47, %p48
    %p50 = scmp.ne.s32.totalorder %s42, %s44
    %p51 = scmp.eq.s32.totalorder %s13, 1
    %p52 = por %p50, %p51
    %p53 = scmp.ne.s32.totalorder %s44, %s45
    %p54 = scmp.eq.s32.totalorder %s13, 0
    %p55 = por %p53, %p54
    %p56 = scmp.ne.s32.totalorder %s44, %s45
    %p57 = scmp.eq.s32.totalorder %s14, 1
    %p58 = por %p56, %p57
    %p60 = scmp.ne.s32.totalorder %s45, %s59
    %p61 = scmp.eq.s32.totalorder %s14, 0
    %p62 = por %p60, %p61
    %s63 = ssub.s32 %s8, %s15
    %p64 = scmp.eq.s32.totalorder %s63, 0
    %s66 = sadd.s32 %s65, 1
    %s67 = scalar_select %p64, %s65, %s66
    %p70 = pneg %p64
    %p71 = scmp.eq.s32.totalorder %s8, 1
    %p72 = por %p70, %p71
    %p73 = scmp.ne.s32.totalorder %s65, %s68
    %p74 = scmp.eq.s32.totalorder %s8, 0
    %p75 = por %p73, %p74
    %p76 = scmp.ne.s32.totalorder %s65, %s68
    %p77 = scmp.eq.s32.totalorder %s13, 1
    %p78 = por %p76, %p77
    %p79 = scmp.ne.s32.totalorder %s68, %s69
    %p80 = scmp.eq.s32.totalorder %s13, 0
    %p81 = por %p79, %p80
    %p82 = scmp.ne.s32.totalorder %s68, %s69
    %p83 = scmp.eq.s32.totalorder %s14, 1
    %p84 = por %p82, %p83
    %p86 = scmp.ne.s32.totalorder %s69, %s85
    %p87 = scmp.eq.s32.totalorder %s14, 0
    %p88 = por %p86, %p87
    %p89 = scmp.le.s32.totalorder 1, %s8
    %p90 = scmp.lt.s32.totalorder %s8, 3
    %p91 = pnand %p89, %p90
    %p92 = pneg %p91
    // Predicated region
    $region9: #{hazard_layer.1} parent=5 // pred_check
      _
    $region10: #{hazard_layer.1} parent=5 // pred_check_branch
      %94 = sbr.rel (%p91) target = $region12
    $region11: #{hazard_layer.1} parent=5 // pred_region
      %s95 = ssub.s32 %s8, 1
      // Predicated region
      $region13: #{hazard_layer.1} parent=11 // pred_check
        %p96 = pneg %p55
      $region14: #{hazard_layer.1} parent=11 // pred_check_branch
        %98 = sbr.rel (%p96) target = $region16
      $region15: #{hazard_layer.1} parent=11 // pred_region
        _
      $region16: #{hazard_layer.1} parent=11 // pred_fallthru
        _
    $region12: #{hazard_layer.1} parent=5 // pred_fallthru
      _
    %p99 = scmp.lt.s32.totalorder %s8, 2
    // Predicated region
    $region17: #{hazard_layer.1} parent=5 // pred_check
      %p100 = pneg %p99
    $region18: #{hazard_layer.1} parent=5 // pred_check_branch
      %102 = sbr.rel (%p100) target = $region20
    $region19: #{hazard_layer.1} parent=5 // pred_region
      // Predicated region
      $region21: #{hazard_layer.1} parent=19 // pred_check
        %p103 = pneg %p28
      $region22: #{hazard_layer.1} parent=19 // pred_check_branch
        %105 = sbr.rel (%p103) target = $region24
      $region23: #{hazard_layer.1} parent=19 // pred_region
        %p106 = scmp.lt.s32.totalorder %s8, 1
        %s107 = scalar_select %p106, %s8, 1
        %s108 = smul.addr %s107, 2
        %s109 = smul.addr %s108, 8
        %s110 = scalar_lea.vmem %s0, %s109
      $region24: #{hazard_layer.1} parent=19 // pred_fallthru
        _
    $region20: #{hazard_layer.1} parent=5 // pred_fallthru
      _
    %p111 = scmp.le.s32.totalorder 1, %s8
    %p112 = scmp.lt.s32.totalorder %s8, 3
    %p113 = pnand %p111, %p112
    %p114 = pneg %p113
    // Predicated region
    $region25: #{hazard_layer.1} parent=5 // pred_check
      _
    $region26: #{hazard_layer.1} parent=5 // pred_check_branch
      %116 = sbr.rel (%p113) target = $region28
    $region27: #{hazard_layer.1} parent=5 // pred_region
      %s117 = ssub.s32 %s8, 1
      %p118 = scmp.lt.s32.totalorder %s13, 1
      %s119 = scalar_select %p118, %s13, 1
      %s120 = smul.addr %s119, 2
      %s121 = smul.addr %s120, 8
      %s122 = scalar_lea.vmem %s0, %s121
      %p123 = pneg %p34
      %p124 = pneg %p31
      %p125 = pneg %p55
      %p126 = pneg %p52
      %p127 = pneg %p81
      %p128 = pneg %p78
      %p129 = scmp.lt.s32.totalorder %s13, 1
      %s130 = scalar_select %p129, %s13, 1
      %s131 = smul.addr %s130, 8
      %s132 = scalar_lea.vmem %s2, %s131
      %p133 = scmp.lt.s32.totalorder %s13, 1
      %s134 = scalar_select %p133, %s13, 1
      %s135 = smul.addr %s134, 2
      %s136 = smul.addr %s135, 8
      %s137 = scalar_lea.vmem %s0, %s136
      %p138 = scmp.lt.s32.totalorder %s13, 1
      %s139 = scalar_select %p138, %s13, 1
      %s140 = smul.addr %s139, 8
      %s141 = scalar_lea.vmem %s2, %s140
      %v142 = vld [vmem:[%s137] sm:$0xff]
      %v143 = vld [vmem:[%s137 + $0x8] sm:$0xff]
      %v144 = vld [vmem:[%s1] sm:$0xff]
      %v145 = vld [vmem:[%s1 + $0x8] sm:$0xff]
      %v146 = vld [vmem:[%s1 + $0x10] sm:$0xff]
      %v147 = vld [vmem:[%s1 + $0x18] sm:$0xff]
      %v148 = vld [vmem:[%s1 + $0x20] sm:$0xff]
      %v149 = vld [vmem:[%s1 + $0x28] sm:$0xff]
      %v150 = vld [vmem:[%s1 + $0x30] sm:$0xff]
      %v151 = vld [vmem:[%s1 + $0x38] sm:$0xff]
      %v152 = vld [vmem:[%s1 + $0x40] sm:$0xff]
      %v153 = vld [vmem:[%s1 + $0x48] sm:$0xff]
      %v154 = vld [vmem:[%s1 + $0x50] sm:$0xff]
      %v155 = vld [vmem:[%s1 + $0x58] sm:$0xff]
      %v156 = vld [vmem:[%s1 + $0x60] sm:$0xff]
      %v157 = vld [vmem:[%s1 + $0x68] sm:$0xff]
      %v158 = vld [vmem:[%s1 + $0x70] sm:$0xff]
      %v159 = vld [vmem:[%s1 + $0x78] sm:$0xff]
      %v160 = vld [vmem:[%s1 + $0x80] sm:$0xff]
      %v161 = vld [vmem:[%s1 + $0x88] sm:$0xff]
      %vm162 = vcmask 130048
      %v164 = vsel %vm162, %v143, 0
      %166 = vmatpush.msra.mxu0 %v159
      %167 = vmatpush.msra.mxu0 %v158
      %168 = vmatpush.msra.mxu0 %v157
      %169 = vmatpush.msra.mxu0 %v156
      %170 = vmatpush.msra.mxu0 %v155
      %171 = vmatpush.msra.mxu0 %v154
      %172 = vmatpush.msra.mxu0 %v153
      %173 = vmatpush.msra.mxu0 %v152
      %174 = vmatpush.msra.mxu0 %v151
      %175 = vmatpush.msra.mxu0 %v150
      %176 = vmatpush.msra.mxu0 %v149
      %177 = vmatpush.msra.mxu0 %v148
      %178 = vmatpush.msra.mxu0 %v147
      %179 = vmatpush.msra.mxu0 %v146
      %180 = vmatpush.msra.mxu0 %v145
      %181 = vmatpush.msra.mxu0 %v144
      %182 = vmatmul.f32.gmra.mxu0 %v142
      %v183 = vpop.f32.mrf.mxu0
      %v184 = vadd.f32 0.0, %v183
      %185 = vdwg.mxu0
      %186 = vmatpush.msra.mxu0 0.0
      %187 = vmatpush.msra.mxu0 0.0
      %188 = vmatpush.msra.mxu0 0.0
      %189 = vmatpush.msra.mxu0 0.0
      %190 = vmatpush.msra.mxu0 0.0
      %191 = vmatpush.msra.mxu0 0.0
      %192 = vmatpush.msra.mxu0 0.0
      %193 = vmatpush.msra.mxu0 0.0
      %194 = vmatpush.msra.mxu0 0.0
      %195 = vmatpush.msra.mxu0 0.0
      %196 = vmatpush.msra.mxu0 0.0
      %197 = vmatpush.msra.mxu0 0.0
      %198 = vmatpush.msra.mxu0 0.0
      %199 = vmatpush.msra.mxu0 0.0
      %200 = vmatpush.msra.mxu0 %v161
      %201 = vmatpush.msra.mxu0 %v160
      %202 = vmatmul.f32.gmra.mxu0 %v164
      %v203 = vpop.f32.mrf.mxu0
      %v204 = vadd.f32 %v184, %v203
      %205 = vdwg.mxu0
      %206 = vst [vmem:[%s141] sm:$0xff] %v204
      %p207 = scmp.lt.s32.totalorder %s13, 1
      %s208 = scalar_select %p207, %s13, 1
      %s209 = smul.addr %s208, 8
      %s210 = scalar_lea.vmem %s2, %s209
      // Predicated region
      $region29: #{hazard_layer.1} parent=27 // pred_check
        %p211 = pneg %p78
      $region30: #{hazard_layer.1} parent=27 // pred_check_branch
        %213 = sbr.rel (%p211) target = $region32
      $region31: #{hazard_layer.1} parent=27 // pred_region
        _
      $region32: #{hazard_layer.1} parent=27 // pred_fallthru
        _
    $region28: #{hazard_layer.1} parent=5 // pred_fallthru
      _
    %p214 = scmp.le.s32.totalorder 2, %s8
    // Predicated region
    $region33: #{hazard_layer.1} parent=5 // pred_check
      %p215 = pneg %p214
    $region34: #{hazard_layer.1} parent=5 // pred_check_branch
      %217 = sbr.rel (%p215) target = $region36
    $region35: #{hazard_layer.1} parent=5 // pred_region
      %s218 = ssub.s32 %s8, 2
      // Predicated region
      $region37: #{hazard_layer.1} parent=35 // pred_check
        %p219 = pneg %p84
      $region38: #{hazard_layer.1} parent=35 // pred_check_branch
        %221 = sbr.rel (%p219) target = $region40
      $region39: #{hazard_layer.1} parent=35 // pred_region
        %p222 = scmp.lt.s32.totalorder %s14, 1
        %s223 = scalar_select %p222, %s14, 1
        %s224 = smul.addr %s223, 8
        %s225 = scalar_lea.vmem %s2, %s224
      $region40: #{hazard_layer.1} parent=35 // pred_fallthru
        _
    $region36: #{hazard_layer.1} parent=5 // pred_fallthru
      _
  $region6: #{hazard_layer.1} parent=0 // loop_footer
    %s12 = sadd.s32 1, %s8
  $region7: #{hazard_layer.1} parent=0 // loop_footer_branch
    %7 = sbr.rel target = $region3
  $region8: #{hazard_layer.1} parent=0 // loop_exit
    _

</llo_original>
